<compile_context>
chip_gen: v7x
topology: tpu7x:2x2x1
jax: 0.10.0
libtpu: 0.0.40
codegen_flags: <defaults>
</compile_context>

<pallas_src>
import jax
import jax.numpy as jnp
from jax.experimental import pallas as pl
from jax.experimental.pallas import tpu as pltpu

_LANE = 128
_SUBLANE = 8


def _round_up(n, m):
    return ((n + m - 1) // m) * m


def _cdiv(a, b):
    return -(-a // b)


# ---------------------------------------------------------------------------
# Probe once whether this jax version supports single-buffered BlockSpecs via
# pipeline_mode=pl.Buffered(1); fall back to default (double-buffered) if not.
try:
    pl.BlockSpec((8, 128), lambda i: (0, 0), pipeline_mode=pl.Buffered(1))
    _HAS_PIPELINE_MODE = True
except Exception:  # pragma: no cover - older/newer API without pipeline_mode
    _HAS_PIPELINE_MODE = False


def _make_resident_spec(shape):
    """Full-array block with a constant index_map -> stays resident in VMEM.

    Single-buffered when supported (fetched once, never changes)."""
    index_map = lambda *_: (0,) * len(shape)
    if _HAS_PIPELINE_MODE:
        return pl.BlockSpec(shape, index_map, pipeline_mode=pl.Buffered(1))
    return pl.BlockSpec(shape, index_map)


def _device_defaults():
    """Per-generation tiling / VMEM defaults (safe fallback when unknown)."""
    try:
        kind = jax.devices()[0].device_kind.lower()
    except Exception:
        kind = ""
    if "v7" in kind:
        # 64 MiB physical VMEM, 2 TensorCores -> smaller tiles, >=2 grid steps.
        return {"block_b": 512, "min_tiles": 2, "vmem_cap": 40 << 20}
    if "v5" in kind or "v6" in kind:
        # 128 MiB VMEM, single TensorCore -> bigger tiles, no forced split.
        return {"block_b": 1024, "min_tiles": 1, "vmem_cap": 96 << 20}
    return {"block_b": 512, "min_tiles": 1, "vmem_cap": 40 << 20}


def _choose_batch_tile(B, block_b, min_tiles):
    """Pick (tb, b_pad, n_tiles).

    Evenly splits B over the minimum number of tiles, then rounds the tile up
    to the best alignment (256 / 128 / 16 rows) that minimizes padded rows.
    min_tiles >= 2 (v7x) guarantees both TensorCores get work when B allows.
    """
    n0 = _cdiv(B, block_b)
    if B >= 32:  # only force a split when each half still has real rows
        n0 = max(n0, min_tiles)
    base = _cdiv(B, n0)

    best = None
    for rank, align in enumerate((256, 128, 16)):
        tb = max(16, _round_up(base, align))
        b_pad = _round_up(B, tb)
        waste = b_pad - B
        key = (waste, rank)  # least padding; prefer larger alignment on ties
        if best is None or key < best[0]:
            best = (key, tb, b_pad, b_pad // tb)
    return best[1], best[2], best[3]


# ---------------------------------------------------------------------------
# Kernel body: three dependent GEMMs (MXU, bf16 in / f32 accumulate) with the
# folded BN+bias add and relu riding on the VPU.
def _mlp_kernel(x_ref,
                w1_ref, c1_ref,
                w2_ref, c2_ref,
                w3_ref, c3_ref,
                o_ref):
    # fc1 + folded(bn1, bias) + relu
    h1 = jnp.dot(x_ref[...], w1_ref[...], preferred_element_type=jnp.float32)
    h1 = jnp.maximum(h1 + c1_ref[...], 0.0)
    # dropout (eval mode) -> identity

    # fc2 + folded(bn2, bias) + relu
    h2 = jnp.dot(h1.astype(w2_ref.dtype), w2_ref[...],
                 preferred_element_type=jnp.float32)
    h2 = jnp.maximum(h2 + c2_ref[...], 0.0)
    # dropout (eval mode) -> identity

    # fc3 + bias (lane-dense padded output)
    out = jnp.dot(h2.astype(w3_ref.dtype), w3_ref[...],
                  preferred_element_type=jnp.float32)
    o_ref[...] = out + c3_ref[...]


def _pad2(a, rows, cols):
    return jnp.pad(a, ((0, rows - a.shape[0]), (0, cols - a.shape[1])))


# ---------------------------------------------------------------------------
# One-time preprocessing: call ONCE, reuse across forwards.
def prepare_pallas_params(params, eps=1e-5):
    """Fold BN (inference running stats) + linear bias into the weights, pad
    all feature dims to lane-dense multiples of 128 and cast matmul weights to
    bf16.  relu(bn(x @ W + b)) == relu(x @ (W * s) + (b * s + t))."""
    in_features, h1_f = params["w1"].shape
    h2_f = params["w2"].shape[1]
    num_classes = params["w3"].shape[1]

    s1 = params["bn1_gamma"] / jnp.sqrt(params["bn1_var"] + eps)
    t1 = params["bn1_beta"] - params["bn1_mean"] * s1
    s2 = params["bn2_gamma"] / jnp.sqrt(params["bn2_var"] + eps)
    t2 = params["bn2_beta"] - params["bn2_mean"] * s2

    fi = _round_up(in_features, _LANE)
    f1 = _round_up(h1_f, _LANE)
    f2 = _round_up(h2_f, _LANE)
    fc = _round_up(num_classes, _LANE)

    return {
        "w1": _pad2(params["w1"] * s1[None, :], fi, f1).astype(jnp.bfloat16),
        "c1": _pad2((params["b1"] * s1 + t1).reshape(1, -1), 1, f1).astype(jnp.float32),
        "w2": _pad2(params["w2"] * s2[None, :], f1, f2).astype(jnp.bfloat16),
        "c2": _pad2((params["b2"] * s2 + t2).reshape(1, -1), 1, f2).astype(jnp.float32),
        "w3": _pad2(params["w3"], f2, fc).astype(jnp.bfloat16),
        "c3": _pad2(params["b3"].reshape(1, -1), 1, fc).astype(jnp.float32),
        "dims": (in_features, h1_f, h2_f, num_classes),  # python ints (static)
    }


def improved_pointnet_forward(x, prep, *, block_b=None, force_pallas=False):
    """x: (B, input_size) float32.  prep: output of prepare_pallas_params."""
    B, in_features = x.shape
    in_f, _, _, num_classes = prep["dims"]
    assert in_features == in_f, "input feature dim mismatch with prepared params"

    w1_p, c1_p = prep["w1"], prep["c1"]
    w2_p, c2_p = prep["w2"], prep["c2"]
    w3_p, c3_p = prep["w3"], prep["c3"]
    fi, f1 = w1_p.shape
    f2 = w2_p.shape[1]
    fc = w3_p.shape[1]

    # Small-problem fallback: a single tiny grid step is dominated by fixed
    # launch/DMA overhead -> let XLA fuse it (same numerics: bf16 in, f32 acc).
    if not force_pallas and B <= 32 and max(fi, f1, f2, fc) <= _LANE:
        xb = x.astype(jnp.bfloat16)
        if fi != in_features:
            xb = jnp.pad(xb, ((0, 0), (0, fi - in_features)))
        h1 = jnp.maximum(jnp.dot(xb, w1_p, preferred_element_type=jnp.float32) + c1_p, 0.0)
        h2 = jnp.maximum(jnp.dot(h1.astype(jnp.bfloat16), w2_p,
                                 preferred_element_type=jnp.float32) + c2_p, 0.0)
        out = jnp.dot(h2.astype(jnp.bfloat16), w3_p,
                      preferred_element_type=jnp.float32) + c3_p
        return out[:, :num_classes]

    defaults = _device_defaults()
    if block_b is None:
        block_b = defaults["block_b"]
    min_tiles = defaults["min_tiles"]
    vmem_cap = defaults["vmem_cap"]

    tb, b_pad, n_tiles = _choose_batch_tile(B, block_b, min_tiles)

    # VMEM budget: resident weights/biases (single-buffered when supported),
    # double-buffered x / out tiles, plus Mosaic scratch for the f32 h1/h2
    # intermediates and their bf16 copies.  Shrink the tile if over the cap.
    resident_mult = 1 if _HAS_PIPELINE_MODE else 2
    resident_bytes = resident_mult * (
        (w1_p.size + w2_p.size + w3_p.size) * 2        # bf16 weights
        + (c1_p.size + c2_p.size + c3_p.size) * 4)     # f32 fused biases

    def _vmem_needed(tb_):
        act = 2 * tb_ * fi * 2                 # double-buffered bf16 x tiles
        outb = 2 * tb_ * fc * 4                # double-buffered f32 out tiles
        inter = tb_ * (f1 + f2) * (4 + 2)      # f32 h1/h2 + bf16 copies
        return resident_bytes + act + outb + inter

    while _vmem_needed(tb) > vmem_cap and tb > 16:
        tb = max(16, _round_up(tb // 2, 16))
        b_pad = _round_up(B, tb)
        n_tiles = b_pad // tb

    vmem_limit = min(vmem_cap,
                     max(32 << 20, int(1.5 * _vmem_needed(tb)) + (4 << 20)))

    # Pad/cast x only when needed (cast first -> half the copy; fuses under jit).
    x_b = x.astype(jnp.bfloat16)
    if b_pad != B or fi != in_features:
        x_b = jnp.pad(x_b, ((0, b_pad - B), (0, fi - in_features)))

    flops = 2 * b_pad * (fi * f1 + f1 * f2 + f2 * fc)
    bytes_accessed = (x_b.size * 2
                      + (w1_p.size + w2_p.size + w3_p.size) * 2
                      + (c1_p.size + c2_p.size + c3_p.size) * 4
                      + b_pad * fc * 4)

    out = pl.pallas_call(
        _mlp_kernel,
        out_shape=jax.ShapeDtypeStruct((b_pad, fc), jnp.float32),
        grid_spec=pltpu.PrefetchScalarGridSpec(
            num_scalar_prefetch=0,
            grid=(n_tiles,),
            in_specs=[
                pl.BlockSpec((tb, fi), lambda i: (i, 0)),   # activation tile
                _make_resident_spec(w1_p.shape), _make_resident_spec(c1_p.shape),
                _make_resident_spec(w2_p.shape), _make_resident_spec(c2_p.shape),
                _make_resident_spec(w3_p.shape), _make_resident_spec(c3_p.shape),
            ],
            out_specs=pl.BlockSpec((tb, fc), lambda i: (i, 0)),
        ),
        compiler_params=pltpu.CompilerParams(
            dimension_semantics=("parallel",),   # shards batch grid across TCs (v7x)
            vmem_limit_bytes=int(vmem_limit),
        ),
        cost_estimate=pl.CostEstimate(
            flops=int(flops), transcendentals=0,
            bytes_accessed=int(bytes_accessed)),
    )(x_b, w1_p, c1_p, w2_p, c2_p, w3_p, c3_p)

    return out[:B, :num_classes]


# ---------------------------------------------------------------------------
def init_params(key, input_size, h1, h2, num_classes):
    ks = jax.random.split(key, 6)
    return {
        # Linear weights stored as (in, out) — transpose of PyTorch's (out, in).
        "w1": jax.random.normal(ks[0], (input_size, h1), jnp.float32) * 0.1,
        "b1": jax.random.normal(ks[1], (h1,), jnp.float32) * 0.1,
        "w2": jax.random.normal(ks[2], (h1, h2), jnp.float32) * 0.1,
        "b2": jax.random.normal(ks[3], (h2,), jnp.float32) * 0.1,
        "w3": jax.random.normal(ks[4], (h2, num_classes), jnp.float32) * 0.1,
        "b3": jax.random.normal(ks[5], (num_classes,), jnp.float32) * 0.1,
        # BatchNorm1d params / running stats (inference mode).
        "bn1_gamma": jnp.full((h1,), 1.2, jnp.float32),
        "bn1_beta":  jnp.full((h1,), 0.1, jnp.float32),
        "bn1_mean":  jnp.full((h1,), 0.05, jnp.float32),
        "bn1_var":   jnp.full((h1,), 0.9, jnp.float32),
        "bn2_gamma": jnp.full((h2,), 0.8, jnp.float32),
        "bn2_beta":  jnp.full((h2,), -0.05, jnp.float32),
        "bn2_mean":  jnp.full((h2,), -0.02, jnp.float32),
        "bn2_var":   jnp.full((h2,), 1.1, jnp.float32),
    }


def reference_forward(x, params, eps=1e-5):
    """Plain-JAX f32 reference mirroring the PyTorch forward (eval mode)."""
    def bn(v, g, b, m, var):
        return g * (v - m) / jnp.sqrt(var + eps) + b

    h1 = x @ params["w1"] + params["b1"]
    h1 = jax.nn.relu(bn(h1, params["bn1_gamma"], params["bn1_beta"],
                        params["bn1_mean"], params["bn1_var"]))
    h2 = h1 @ params["w2"] + params["b2"]
    h2 = jax.nn.relu(bn(h2, params["bn2_gamma"], params["bn2_beta"],
                        params["bn2_mean"], params["bn2_var"]))
    return h2 @ params["w3"] + params["b3"]


if __name__ == "__main__":
    input_size, h1, h2, num_classes = 16, 32, 32, 8

    key = jax.random.PRNGKey(0)
    kx1, kx2, kp = jax.random.split(key, 3)
    params = init_params(kp, input_size, h1, h2, num_classes)

    # One-time preprocessing (hoisted out of the per-call path).
    prep = prepare_pallas_params(params)

    # --- tiny batch, forced through the Pallas kernel (single tile) ---------
    x_small = jax.random.normal(kx1, (8, input_size), jnp.float32)
    fwd_small = jax.jit(lambda xx: improved_pointnet_forward(xx, prep, force_pallas=True))
    out_small = jax.block_until_ready(fwd_small(x_small))
    ref_small = reference_forward(x_small, params)
    assert out_small.shape == (8, num_classes)
    # bf16 MXU inputs (f32 accumulate) vs pure-f32 reference -> ~1e-3-level diffs.
    assert jnp.allclose(out_small, ref_small, atol=3e-2, rtol=3e-2), "small-batch mismatch"

    # --- ragged medium batch: exercises even-split batch tiling -------------
    x_med = jax.random.normal(kx2, (300, input_size), jnp.float32)
    fwd_med = jax.jit(lambda xx: improved_pointnet_forward(xx, prep))
    out_med = jax.block_until_ready(fwd_med(x_med))
    ref_med = reference_forward(x_med, params)
    assert out_med.shape == (300, num_classes)
    assert jnp.allclose(out_med, ref_med, atol=3e-2, rtol=3e-2), "medium-batch mismatch"

    print("KERNEL_OK")
</pallas_src>

<mosaic_0001>
module attributes {stable_mosaic.version = 11 : i64} {
  func.func @_mlp_kernel(%arg0: i32, %arg1: memref<16x128xbf16, #tpu.memory_space<vmem>>, %arg2: memref<128x128xbf16, #tpu.memory_space<vmem>>, %arg3: memref<1x128xf32, #tpu.memory_space<vmem>>, %arg4: memref<128x128xbf16, #tpu.memory_space<vmem>>, %arg5: memref<1x128xf32, #tpu.memory_space<vmem>>, %arg6: memref<128x128xbf16, #tpu.memory_space<vmem>>, %arg7: memref<1x128xf32, #tpu.memory_space<vmem>>, %arg8: memref<16x128xf32, #tpu.memory_space<vmem>>) attributes {dimension_semantics = [#tpu.dimension_semantics<parallel>], iteration_bounds = array<i64: 1>, scalar_prefetch = 0 : i64, scratch_operands = 0 : i64, tpu.core_type = #tpu.core_type<tc>, window_params = [{transform_indices = @transform_0, window_bounds = array<i64: 16, 128>}, {pipeline_mode = #tpu.pipeline_mode<synchronous>, transform_indices = @transform_1, window_bounds = array<i64: 128, 128>}, {pipeline_mode = #tpu.pipeline_mode<synchronous>, transform_indices = @transform_2, window_bounds = array<i64: 1, 128>}, {pipeline_mode = #tpu.pipeline_mode<synchronous>, transform_indices = @transform_3, window_bounds = array<i64: 128, 128>}, {pipeline_mode = #tpu.pipeline_mode<synchronous>, transform_indices = @transform_4, window_bounds = array<i64: 1, 128>}, {pipeline_mode = #tpu.pipeline_mode<synchronous>, transform_indices = @transform_5, window_bounds = array<i64: 128, 128>}, {pipeline_mode = #tpu.pipeline_mode<synchronous>, transform_indices = @transform_6, window_bounds = array<i64: 1, 128>}, {transform_indices = @transform_7, window_bounds = array<i64: 16, 128>}]} {
    %c0 = arith.constant 0 : index
    %c0_0 = arith.constant 0 : index
    %0 = vector.load %arg1[%c0, %c0_0] : memref<16x128xbf16, #tpu.memory_space<vmem>>, vector<16x128xbf16>
    %c0_1 = arith.constant 0 : index
    %c0_2 = arith.constant 0 : index
    %1 = vector.load %arg2[%c0_1, %c0_2] : memref<128x128xbf16, #tpu.memory_space<vmem>>, vector<128x128xbf16>
    %cst = arith.constant dense<0.000000e+00> : vector<16x128xf32>
    %2 = tpu.matmul %0, %1, %cst {dimension_numbers = #tpu.dot_dimension_numbers<[1], [0], [0], [1], [0, 0, 1, 1], [], []>} : vector<16x128xbf16>, vector<128x128xbf16>, vector<16x128xf32> -> vector<16x128xf32>
    %c0_3 = arith.constant 0 : index
    %c0_4 = arith.constant 0 : index
    %3 = vector.load %arg3[%c0_3, %c0_4] : memref<1x128xf32, #tpu.memory_space<vmem>>, vector<1x128xf32>
    %4 = vector.broadcast %3 : vector<1x128xf32> to vector<16x128xf32>
    %5 = arith.addf %2, %4 : vector<16x128xf32>
    %cst_5 = arith.constant 0.000000e+00 : f32
    %6 = vector.broadcast %cst_5 : f32 to vector<16x128xf32>
    %7 = arith.maximumf %5, %6 : vector<16x128xf32>
    %8 = arith.truncf %7 : vector<16x128xf32> to vector<16x128xbf16>
    %c0_6 = arith.constant 0 : index
    %c0_7 = arith.constant 0 : index
    %9 = vector.load %arg4[%c0_6, %c0_7] : memref<128x128xbf16, #tpu.memory_space<vmem>>, vector<128x128xbf16>
    %cst_8 = arith.constant dense<0.000000e+00> : vector<16x128xf32>
    %10 = tpu.matmul %8, %9, %cst_8 {dimension_numbers = #tpu.dot_dimension_numbers<[1], [0], [0], [1], [0, 0, 1, 1], [], []>} : vector<16x128xbf16>, vector<128x128xbf16>, vector<16x128xf32> -> vector<16x128xf32>
    %c0_9 = arith.constant 0 : index
    %c0_10 = arith.constant 0 : index
    %11 = vector.load %arg5[%c0_9, %c0_10] : memref<1x128xf32, #tpu.memory_space<vmem>>, vector<1x128xf32>
    %12 = vector.broadcast %11 : vector<1x128xf32> to vector<16x128xf32>
    %13 = arith.addf %10, %12 : vector<16x128xf32>
    %cst_11 = arith.constant 0.000000e+00 : f32
    %14 = vector.broadcast %cst_11 : f32 to vector<16x128xf32>
    %15 = arith.maximumf %13, %14 : vector<16x128xf32>
    %16 = arith.truncf %15 : vector<16x128xf32> to vector<16x128xbf16>
    %c0_12 = arith.constant 0 : index
    %c0_13 = arith.constant 0 : index
    %17 = vector.load %arg6[%c0_12, %c0_13] : memref<128x128xbf16, #tpu.memory_space<vmem>>, vector<128x128xbf16>
    %cst_14 = arith.constant dense<0.000000e+00> : vector<16x128xf32>
    %18 = tpu.matmul %16, %17, %cst_14 {dimension_numbers = #tpu.dot_dimension_numbers<[1], [0], [0], [1], [0, 0, 1, 1], [], []>} : vector<16x128xbf16>, vector<128x128xbf16>, vector<16x128xf32> -> vector<16x128xf32>
    %c0_15 = arith.constant 0 : index
    %c0_16 = arith.constant 0 : index
    %19 = vector.load %arg7[%c0_15, %c0_16] : memref<1x128xf32, #tpu.memory_space<vmem>>, vector<1x128xf32>
    %20 = vector.broadcast %19 : vector<1x128xf32> to vector<16x128xf32>
    %21 = arith.addf %18, %20 : vector<16x128xf32>
    %c0_17 = arith.constant 0 : index
    %c0_18 = arith.constant 0 : index
    %22 = vector.load %arg8[%c0_17, %c0_18] : memref<16x128xf32, #tpu.memory_space<vmem>>, vector<16x128xf32>
    tpu.vector_store %arg8[%c0_17, %c0_18], %21 {strides = array<i32>} : memref<16x128xf32, #tpu.memory_space<vmem>>, vector<16x128xf32>,
    return
  }
  func.func @transform_0(%arg0: i32) -> (i32, i32) {
    %c0_i32 = arith.constant 0 : i32
    %c0_i32_0 = arith.constant 0 : i32
    return %arg0, %c0_i32 : i32, i32
  }
  func.func @transform_1(%arg0: i32) -> (i32, i32) {
    %c0_i32 = arith.constant 0 : i32
    %c0_i32_0 = arith.constant 0 : i32
    %c0_i32_1 = arith.constant 0 : i32
    return %c0_i32, %c0_i32_0 : i32, i32
  }
  func.func @transform_2(%arg0: i32) -> (i32, i32) {
    %c0_i32 = arith.constant 0 : i32
    %c0_i32_0 = arith.constant 0 : i32
    %c0_i32_1 = arith.constant 0 : i32
    return %c0_i32, %c0_i32_0 : i32, i32
  }
  func.func @transform_3(%arg0: i32) -> (i32, i32) {
    %c0_i32 = arith.constant 0 : i32
    %c0_i32_0 = arith.constant 0 : i32
    %c0_i32_1 = arith.constant 0 : i32
    return %c0_i32, %c0_i32_0 : i32, i32
  }
  func.func @transform_4(%arg0: i32) -> (i32, i32) {
    %c0_i32 = arith.constant 0 : i32
    %c0_i32_0 = arith.constant 0 : i32
    %c0_i32_1 = arith.constant 0 : i32
    return %c0_i32, %c0_i32_0 : i32, i32
  }
  func.func @transform_5(%arg0: i32) -> (i32, i32) {
    %c0_i32 = arith.constant 0 : i32
    %c0_i32_0 = arith.constant 0 : i32
    %c0_i32_1 = arith.constant 0 : i32
    return %c0_i32, %c0_i32_0 : i32, i32
  }
  func.func @transform_6(%arg0: i32) -> (i32, i32) {
    %c0_i32 = arith.constant 0 : i32
    %c0_i32_0 = arith.constant 0 : i32
    %c0_i32_1 = arith.constant 0 : i32
    return %c0_i32, %c0_i32_0 : i32, i32
  }
  func.func @transform_7(%arg0: i32) -> (i32, i32) {
    %c0_i32 = arith.constant 0 : i32
    %c0_i32_0 = arith.constant 0 : i32
    return %arg0, %c0_i32 : i32, i32
  }
}

</mosaic_0001>

<llo_original>
// kernel: _lambda_.1
$region0: #{_lambda_.1}
  #allocation0 [shape = 'u32[]', space=smem, size = 0x4, offset = 0x4, fixed_abs, tag = 'smem constant byte address 0x4 - core index']
  #allocation1 [shape = 'u32[144,128]{1,0:T(1,128)}', space=vmem, size = 0x12000, scoped, tag = 'internal scratch']
  %s0 = inlined_call_operand.vmem [shape: bf16[16,128], index: 0, kind: input, shape index: {}]
  %s1 = inlined_call_operand.hbm [shape: bf16[128,128], index: 1, kind: input, shape index: {}]
  %s2 = inlined_call_operand.vmem [shape: f32[1,128], index: 2, kind: input, shape index: {}]
  %s3 = inlined_call_operand.hbm [shape: bf16[128,128], index: 3, kind: input, shape index: {}]
  %s4 = inlined_call_operand.vmem [shape: f32[1,128], index: 4, kind: input, shape index: {}]
  %s5 = inlined_call_operand.hbm [shape: bf16[128,128], index: 5, kind: input, shape index: {}]
  %s6 = inlined_call_operand.vmem [shape: f32[1,128], index: 6, kind: input, shape index: {}]
  %s7 = inlined_call_operand.vmem [shape: f32[16,128], index: 7, kind: output, shape index: {}]
  %s8 = sld [smem:[#allocation0]]
  $region50: #{_lambda_.1} parent=0
    _
  %s10 = ssub.s32 1, %s8
  %s11 = scalar_select 0, %s10, %s8
  $region1: #{_lambda_.1} parent=0
    #allocation2 [shape = 'u8[32768]{0}', space=vmem, size = 0x8000, scoped, tag = 'input window, operand 1, single buffered']
    #allocation3 [shape = 's32[1]{0}', space=sflag, size = 0x4, scoped, tag = 'scoped memory for _lambda_.1']
    #allocation4 [shape = 'u8[32768]{0}', space=vmem, size = 0x8000, scoped, tag = 'input window, operand 3, single buffered']
    #allocation5 [shape = 's32[1]{0}', space=sflag, size = 0x4, scoped, tag = 'scoped memory for _lambda_.1']
    #allocation6 [shape = 'u8[32768]{0}', space=vmem, size = 0x8000, scoped, tag = 'input window, operand 5, single buffered']
    %12 = vsyncpa [#allocation3], 0
    %13 = vsyncpa [#allocation5], 0
    // Predicated region
    $region2: #{_lambda_.1} parent=1 // pred_check
      _
    $region3: #{_lambda_.1} parent=1 // pred_check_branch
      %15 = sbr.rel (0) target = $region5
    $region4: #{_lambda_.1} parent=1 // pred_region
      _
    $region5: #{_lambda_.1} parent=1 // pred_fallthru
      _
    // Predicated region
    $region6: #{_lambda_.1} parent=1 // pred_check
      _
    $region7: #{_lambda_.1} parent=1 // pred_check_branch
      %17 = sbr.rel (0) target = $region9
    $region8: #{_lambda_.1} parent=1 // pred_region
      %s19 = ssub.s32 1024, 1024
      %20 = vsyncadd [#allocation3], %s19
      %s21 = sshll.u32 [#allocation2], 4
      %s22 = int_to_ptr.vmem [resolvable:$true] %s21
      %27 = dma.hbm_to_vmem [thread:$0]  %s1, 1024, %s22, [#allocation3], 64, 64, 4
    $region9: #{_lambda_.1} parent=1 // pred_fallthru
      _
    // Predicated region
    $region10: #{_lambda_.1} parent=1 // pred_check
      _
    $region11: #{_lambda_.1} parent=1 // pred_check_branch
      %29 = sbr.rel (0) target = $region13
    $region12: #{_lambda_.1} parent=1 // pred_region
      _
    $region13: #{_lambda_.1} parent=1 // pred_fallthru
      _
    // Predicated region
    $region14: #{_lambda_.1} parent=1 // pred_check
      _
    $region15: #{_lambda_.1} parent=1 // pred_check_branch
      %31 = sbr.rel (0) target = $region17
    $region16: #{_lambda_.1} parent=1 // pred_region
      %s33 = ssub.s32 1024, 1024
      %34 = vsyncadd [#allocation5], %s33
      %s35 = sshll.u32 [#allocation4], 4
      %s36 = int_to_ptr.vmem [resolvable:$true] %s35
      %41 = dma.hbm_to_vmem [thread:$0]  %s3, 1024, %s36, [#allocation5], 64, 64, 4
    $region17: #{_lambda_.1} parent=1 // pred_fallthru
      _
    // Predicated region
    $region18: #{_lambda_.1} parent=1 // pred_check
      _
    $region19: #{_lambda_.1} parent=1 // pred_check_branch
      %43 = sbr.rel (0) target = $region21
    $region20: #{_lambda_.1} parent=1 // pred_region
      _
    $region21: #{_lambda_.1} parent=1 // pred_fallthru
      _
    // Predicated region
    $region22: #{_lambda_.1} parent=1 // pred_check
      _
    $region23: #{_lambda_.1} parent=1 // pred_check_branch
      %45 = sbr.rel (0) target = $region25
    $region24: #{_lambda_.1} parent=1 // pred_region
      %s47 = ssub.s32 1024, 1024
      %48 = vsyncadd [#allocation5], %s47
      %s49 = sshll.u32 [#allocation6], 4
      %s50 = int_to_ptr.vmem [resolvable:$true] %s49
      %55 = dma.hbm_to_vmem [thread:$0]  %s5, 1024, %s50, [#allocation5], 64, 64, 4
    $region25: #{_lambda_.1} parent=1 // pred_fallthru
      _
    // Predicated region
    $region26: #{_lambda_.1} parent=1 // pred_check
      _
    $region27: #{_lambda_.1} parent=1 // pred_check_branch
      %57 = sbr.rel (0) target = $region29
    $region28: #{_lambda_.1} parent=1 // pred_region
      _
    $region29: #{_lambda_.1} parent=1 // pred_fallthru
      _
    // Predicated region
    $region30: #{_lambda_.1} parent=1 // pred_check
      _
    $region31: #{_lambda_.1} parent=1 // pred_check_branch
      %59 = sbr.rel (0) target = $region33
    $region32: #{_lambda_.1} parent=1 // pred_region
      %60 = dma.done [#allocation3], 1024
    $region33: #{_lambda_.1} parent=1 // pred_fallthru
      _
    // Predicated region
    $region34: #{_lambda_.1} parent=1 // pred_check
      _
    $region35: #{_lambda_.1} parent=1 // pred_check_branch
      %62 = sbr.rel (0) target = $region37
    $region36: #{_lambda_.1} parent=1 // pred_region
      %63 = dma.done [#allocation5], 1024
    $region37: #{_lambda_.1} parent=1 // pred_fallthru
      _
    // Predicated region
    $region38: #{_lambda_.1} parent=1 // pred_check
      _
    $region39: #{_lambda_.1} parent=1 // pred_check_branch
      %65 = sbr.rel (0) target = $region41
    $region40: #{_lambda_.1} parent=1 // pred_region
      %66 = dma.done [#allocation5], 1024
    $region41: #{_lambda_.1} parent=1 // pred_fallthru
      _
    %v68 = vld [vmem:[%s0] sm:$0xf]
    %v69 = vld [vmem:[%s0 + $0x4] sm:$0xf]
    %v70 = vld [vmem:[#allocation2] sm:$0xf]
    %v71 = vld [vmem:[#allocation2 + $0x4] sm:$0xf]
    %v72 = vld [vmem:[#allocation2 + $0x8] sm:$0xf]
    %v73 = vld [vmem:[#allocation2 + $0xc] sm:$0xf]
    %v74 = vld [vmem:[#allocation2 + $0x10] sm:$0xf]
    %v75 = vld [vmem:[#allocation2 + $0x14] sm:$0xf]
    %v76 = vld [vmem:[#allocation2 + $0x18] sm:$0xf]
    %v77 = vld [vmem:[#allocation2 + $0x1c] sm:$0xf]
    %v78 = vld [vmem:[#allocation2 + $0x20] sm:$0xf]
    %v79 = vld [vmem:[#allocation2 + $0x24] sm:$0xf]
    %v80 = vld [vmem:[#allocation2 + $0x28] sm:$0xf]
    %v81 = vld [vmem:[#allocation2 + $0x2c] sm:$0xf]
    %v82 = vld [vmem:[#allocation2 + $0x30] sm:$0xf]
    %v83 = vld [vmem:[#allocation2 + $0x34] sm:$0xf]
    %v84 = vld [vmem:[#allocation2 + $0x38] sm:$0xf]
    %v85 = vld [vmem:[#allocation2 + $0x3c] sm:$0xf]
    %v86 = vld [vmem:[%s2] sm:$0x1]
    %v88 = vlaneseq
    %v89 = vshrl.u32 %v88, 7
    %v90 = vsub.s32 0, %v89
    %v91 = vrot.slane %v86, %v90
    %v95 = vunpack.c.l.b16 %v68
    %v96 = vunpack.c.l.b16 %v69
    %v97 = vpack.c.b16 %v96, %v95
    %v115 = vunpack.c.l.b16 %v70
    %v116 = vunpack.c.l.b16 %v71
    %v117 = vunpack.c.l.b16 %v72
    %v118 = vunpack.c.l.b16 %v73
    %v119 = vunpack.c.l.b16 %v74
    %v120 = vunpack.c.l.b16 %v75
    %v121 = vunpack.c.l.b16 %v76
    %v122 = vunpack.c.l.b16 %v77
    %v123 = vunpack.c.l.b16 %v78
    %v124 = vunpack.c.l.b16 %v79
    %v125 = vunpack.c.l.b16 %v80
    %v126 = vunpack.c.l.b16 %v81
    %v127 = vunpack.c.l.b16 %v82
    %v128 = vunpack.c.l.b16 %v83
    %v129 = vunpack.c.l.b16 %v84
    %v130 = vunpack.c.l.b16 %v85
    %v131 = vpack.c.b16 %v116, %v115
    %v132 = vpack.c.b16 %v118, %v117
    %v133 = vpack.c.b16 %v120, %v119
    %v134 = vpack.c.b16 %v122, %v121
    %v135 = vpack.c.b16 %v124, %v123
    %v136 = vpack.c.b16 %v126, %v125
    %v137 = vpack.c.b16 %v128, %v127
    %v138 = vpack.c.b16 %v130, %v129
    %147 = vmatprep.subr.bf16.mxu0 0
    %148 = vmatpush1.bf16.msra.mxu0 %v131
    %149 = vmatprep.subr.bf16.mxu0 0
    %150 = vmatpush1.bf16.msra.mxu0 %v132
    %151 = vmatprep.subr.bf16.mxu0 0
    %152 = vmatpush1.bf16.msra.mxu0 %v133
    %153 = vmatprep.subr.bf16.mxu0 0
    %154 = vmatpush1.bf16.msra.mxu0 %v134
    %155 = vmatprep.subr.bf16.mxu0 0
    %156 = vmatpush1.bf16.msra.mxu0 %v135
    %157 = vmatprep.subr.bf16.mxu0 0
    %158 = vmatpush1.bf16.msra.mxu0 %v136
    %159 = vmatprep.subr.bf16.mxu0 0
    %160 = vmatpush1.bf16.msra.mxu0 %v137
    %161 = vmatprep.subr.bf16.mxu0 0
    %162 = vmatpush1.bf16.msra.mxu0 %v138
    %163 = vmatprep.subr.bf16.mxu0 0
    %164 = vmatpush1.bf16.msra.mxu0 0
    %165 = vmatprep.subr.bf16.mxu0 0
    %166 = vmatpush1.bf16.msra.mxu0 0
    %167 = vmatprep.subr.bf16.mxu0 0
    %168 = vmatpush1.bf16.msra.mxu0 0
    %169 = vmatprep.subr.bf16.mxu0 0
    %170 = vmatpush1.bf16.msra.mxu0 0
    %171 = vmatprep.subr.bf16.mxu0 0
    %172 = vmatpush1.bf16.msra.mxu0 0
    %173 = vmatprep.subr.bf16.mxu0 0
    %174 = vmatpush1.bf16.msra.mxu0 0
    %175 = vmatprep.subr.bf16.mxu0 0
    %176 = vmatpush1.bf16.msra.mxu0 0
    %177 = vmatprep.subr.bf16.mxu0 0
    %178 = vmatpush1.bf16.msra.mxu0 0
    %179 = vmatprep.mubr.bf16.mxu0 0
    %180 = vmatmul.mubr.bf16.gmra.mrb[0].mxu0 %v97
    %v181 = vpop.f32.mrb[0].mxu0
    %v182 = vadd.f32 %v91, %v181
    %v183 = vpop.f32.mrb[0].mxu0
    %v184 = vpop.f32.mrb[0].mxu0
    %v185 = vadd.f32 %v91, %v184
    %v186 = vpop.f32.mrb[0].mxu0
    %187 = vdwg.mxu0
    %v188 = vmax.f32 %v182, 0.0
    %v189 = vmax.f32 %v185, 0.0
    %v190 = vpack.c.bf16 %v189, %v188
    %v191 = vld [vmem:[#allocation4] sm:$0xf]
    %v192 = vld [vmem:[#allocation4 + $0x4] sm:$0xf]
    %v193 = vld [vmem:[#allocation4 + $0x8] sm:$0xf]
    %v194 = vld [vmem:[#allocation4 + $0xc] sm:$0xf]
    %v195 = vld [vmem:[#allocation4 + $0x10] sm:$0xf]
    %v196 = vld [vmem:[#allocation4 + $0x14] sm:$0xf]
    %v197 = vld [vmem:[#allocation4 + $0x18] sm:$0xf]
    %v198 = vld [vmem:[#allocation4 + $0x1c] sm:$0xf]
    %v199 = vld [vmem:[#allocation4 + $0x20] sm:$0xf]
    %v200 = vld [vmem:[#allocation4 + $0x24] sm:$0xf]
    %v201 = vld [vmem:[#allocation4 + $0x28] sm:$0xf]
    %v202 = vld [vmem:[#allocation4 + $0x2c] sm:$0xf]
    %v203 = vld [vmem:[#allocation4 + $0x30] sm:$0xf]
    %v204 = vld [vmem:[#allocation4 + $0x34] sm:$0xf]
    %v205 = vld [vmem:[#allocation4 + $0x38] sm:$0xf]
    %v206 = vld [vmem:[#allocation4 + $0x3c] sm:$0xf]
    %v207 = vld [vmem:[%s4] sm:$0x1]
    %v209 = vlaneseq
    %v210 = vshrl.u32 %v209, 7
    %v211 = vsub.s32 0, %v210
    %v212 = vrot.slane %v207, %v211
    %v230 = vunpack.c.l.b16 %v191
    %v231 = vunpack.c.l.b16 %v192
    %v232 = vunpack.c.l.b16 %v193
    %v233 = vunpack.c.l.b16 %v194
    %v234 = vunpack.c.l.b16 %v195
    %v235 = vunpack.c.l.b16 %v196
    %v236 = vunpack.c.l.b16 %v197
    %v237 = vunpack.c.l.b16 %v198
    %v238 = vunpack.c.l.b16 %v199
    %v239 = vunpack.c.l.b16 %v200
    %v240 = vunpack.c.l.b16 %v201
    %v241 = vunpack.c.l.b16 %v202
    %v242 = vunpack.c.l.b16 %v203
    %v243 = vunpack.c.l.b16 %v204
    %v244 = vunpack.c.l.b16 %v205
    %v245 = vunpack.c.l.b16 %v206
    %v246 = vpack.c.b16 %v231, %v230
    %v247 = vpack.c.b16 %v233, %v232
    %v248 = vpack.c.b16 %v235, %v234
    %v249 = vpack.c.b16 %v237, %v236
    %v250 = vpack.c.b16 %v239, %v238
    %v251 = vpack.c.b16 %v241, %v240
    %v252 = vpack.c.b16 %v243, %v242
    %v253 = vpack.c.b16 %v245, %v244
    %262 = vmatprep.subr.bf16.mxu0 0
    %263 = vmatpush1.bf16.msra.mxu0 %v246
    %264 = vmatprep.subr.bf16.mxu0 0
    %265 = vmatpush1.bf16.msra.mxu0 %v247
    %266 = vmatprep.subr.bf16.mxu0 0
    %267 = vmatpush1.bf16.msra.mxu0 %v248
    %268 = vmatprep.subr.bf16.mxu0 0
    %269 = vmatpush1.bf16.msra.mxu0 %v249
    %270 = vmatprep.subr.bf16.mxu0 0
    %271 = vmatpush1.bf16.msra.mxu0 %v250
    %272 = vmatprep.subr.bf16.mxu0 0
    %273 = vmatpush1.bf16.msra.mxu0 %v251
    %274 = vmatprep.subr.bf16.mxu0 0
    %275 = vmatpush1.bf16.msra.mxu0 %v252
    %276 = vmatprep.subr.bf16.mxu0 0
    %277 = vmatpush1.bf16.msra.mxu0 %v253
    %278 = vmatprep.subr.bf16.mxu0 0
    %279 = vmatpush1.bf16.msra.mxu0 0
    %280 = vmatprep.subr.bf16.mxu0 0
    %281 = vmatpush1.bf16.msra.mxu0 0
    %282 = vmatprep.subr.bf16.mxu0 0
    %283 = vmatpush1.bf16.msra.mxu0 0
    %284 = vmatprep.subr.bf16.mxu0 0
    %285 = vmatpush1.bf16.msra.mxu0 0
    %286 = vmatprep.subr.bf16.mxu0 0
    %287 = vmatpush1.bf16.msra.mxu0 0
    %288 = vmatprep.subr.bf16.mxu0 0
    %289 = vmatpush1.bf16.msra.mxu0 0
    %290 = vmatprep.subr.bf16.mxu0 0
    %291 = vmatpush1.bf16.msra.mxu0 0
    %292 = vmatprep.subr.bf16.mxu0 0
    %293 = vmatpush1.bf16.msra.mxu0 0
    %294 = vmatprep.mubr.bf16.mxu0 0
    %295 = vmatmul.mubr.bf16.gmra.mrb[0].mxu0 %v190
    %v296 = vpop.f32.mrb[0].mxu0
    %v297 = vadd.f32 %v212, %v296
    %v298 = vpop.f32.mrb[0].mxu0
    %v299 = vpop.f32.mrb[0].mxu0
    %v300 = vadd.f32 %v212, %v299
    %v301 = vpop.f32.mrb[0].mxu0
    %302 = vdwg.mxu0
    %v303 = vmax.f32 %v297, 0.0
    %v304 = vmax.f32 %v300, 0.0
    %v305 = vpack.c.bf16 %v304, %v303
    %v306 = vld [vmem:[#allocation6] sm:$0xf]
    %v307 = vld [vmem:[#allocation6 + $0x4] sm:$0xf]
    %v308 = vld [vmem:[#allocation6 + $0x8] sm:$0xf]
    %v309 = vld [vmem:[#allocation6 + $0xc] sm:$0xf]
    %v310 = vld [vmem:[#allocation6 + $0x10] sm:$0xf]
    %v311 = vld [vmem:[#allocation6 + $0x14] sm:$0xf]
    %v312 = vld [vmem:[#allocation6 + $0x18] sm:$0xf]
    %v313 = vld [vmem:[#allocation6 + $0x1c] sm:$0xf]
    %v314 = vld [vmem:[#allocation6 + $0x20] sm:$0xf]
    %v315 = vld [vmem:[#allocation6 + $0x24] sm:$0xf]
    %v316 = vld [vmem:[#allocation6 + $0x28] sm:$0xf]
    %v317 = vld [vmem:[#allocation6 + $0x2c] sm:$0xf]
    %v318 = vld [vmem:[#allocation6 + $0x30] sm:$0xf]
    %v319 = vld [vmem:[#allocation6 + $0x34] sm:$0xf]
    %v320 = vld [vmem:[#allocation6 + $0x38] sm:$0xf]
    %v321 = vld [vmem:[#allocation6 + $0x3c] sm:$0xf]
    %v322 = vld [vmem:[%s6] sm:$0x1]
    %v324 = vlaneseq
    %v325 = vshrl.u32 %v324, 7
    %v326 = vsub.s32 0, %v325
    %v327 = vrot.slane %v322, %v326
    %v345 = vunpack.c.l.b16 %v306
    %v346 = vunpack.c.l.b16 %v307
    %v347 = vunpack.c.l.b16 %v308
    %v348 = vunpack.c.l.b16 %v309
    %v349 = vunpack.c.l.b16 %v310
    %v350 = vunpack.c.l.b16 %v311
    %v351 = vunpack.c.l.b16 %v312
    %v352 = vunpack.c.l.b16 %v313
    %v353 = vunpack.c.l.b16 %v314
    %v354 = vunpack.c.l.b16 %v315
    %v355 = vunpack.c.l.b16 %v316
    %v356 = vunpack.c.l.b16 %v317
    %v357 = vunpack.c.l.b16 %v318
    %v358 = vunpack.c.l.b16 %v319
    %v359 = vunpack.c.l.b16 %v320
    %v360 = vunpack.c.l.b16 %v321
    %v361 = vpack.c.b16 %v346, %v345
    %v362 = vpack.c.b16 %v348, %v347
    %v363 = vpack.c.b16 %v350, %v349
    %v364 = vpack.c.b16 %v352, %v351
    %v365 = vpack.c.b16 %v354, %v353
    %v366 = vpack.c.b16 %v356, %v355
    %v367 = vpack.c.b16 %v358, %v357
    %v368 = vpack.c.b16 %v360, %v359
    %377 = vmatprep.subr.bf16.mxu0 0
    %378 = vmatpush1.bf16.msra.mxu0 %v361
    %379 = vmatprep.subr.bf16.mxu0 0
    %380 = vmatpush1.bf16.msra.mxu0 %v362
    %381 = vmatprep.subr.bf16.mxu0 0
    %382 = vmatpush1.bf16.msra.mxu0 %v363
    %383 = vmatprep.subr.bf16.mxu0 0
    %384 = vmatpush1.bf16.msra.mxu0 %v364
    %385 = vmatprep.subr.bf16.mxu0 0
    %386 = vmatpush1.bf16.msra.mxu0 %v365
    %387 = vmatprep.subr.bf16.mxu0 0
    %388 = vmatpush1.bf16.msra.mxu0 %v366
    %389 = vmatprep.subr.bf16.mxu0 0
    %390 = vmatpush1.bf16.msra.mxu0 %v367
    %391 = vmatprep.subr.bf16.mxu0 0
    %392 = vmatpush1.bf16.msra.mxu0 %v368
    %393 = vmatprep.subr.bf16.mxu0 0
    %394 = vmatpush1.bf16.msra.mxu0 0
    %395 = vmatprep.subr.bf16.mxu0 0
    %396 = vmatpush1.bf16.msra.mxu0 0
    %397 = vmatprep.subr.bf16.mxu0 0
    %398 = vmatpush1.bf16.msra.mxu0 0
    %399 = vmatprep.subr.bf16.mxu0 0
    %400 = vmatpush1.bf16.msra.mxu0 0
    %401 = vmatprep.subr.bf16.mxu0 0
    %402 = vmatpush1.bf16.msra.mxu0 0
    %403 = vmatprep.subr.bf16.mxu0 0
    %404 = vmatpush1.bf16.msra.mxu0 0
    %405 = vmatprep.subr.bf16.mxu0 0
    %406 = vmatpush1.bf16.msra.mxu0 0
    %407 = vmatprep.subr.bf16.mxu0 0
    %408 = vmatpush1.bf16.msra.mxu0 0
    %409 = vmatprep.mubr.bf16.mxu0 0
    %410 = vmatmul.mubr.bf16.gmra.mrb[0].mxu0 %v305
    %v411 = vpop.f32.mrb[0].mxu0
    %v412 = vadd.f32 %v327, %v411
    %v413 = vpop.f32.mrb[0].mxu0
    %v414 = vpop.f32.mrb[0].mxu0
    %v415 = vadd.f32 %v327, %v414
    %v416 = vpop.f32.mrb[0].mxu0
    %417 = vdwg.mxu0
    %418 = vst [vmem:[%s7] sm:$0xff] %v412
    %419 = vst [vmem:[%s7 + $0x8] sm:$0xff] %v415
    // Predicated region
    $region42: #{_lambda_.1} parent=1 // pred_check
      _
    $region43: #{_lambda_.1} parent=1 // pred_check_branch
      %421 = sbr.rel (0) target = $region45
    $region44: #{_lambda_.1} parent=1 // pred_region
      _
    $region45: #{_lambda_.1} parent=1 // pred_fallthru
      _
    // Predicated region
    $region46: #{_lambda_.1} parent=1 // pred_check
      _
    $region47: #{_lambda_.1} parent=1 // pred_check_branch
      %423 = sbr.rel (0) target = $region49
    $region48: #{_lambda_.1} parent=1 // pred_region
      _
    $region49: #{_lambda_.1} parent=1 // pred_fallthru
      _
    %424 = vsyncpa [#allocation3], 1
    %425 = vsyncpa [#allocation5], 1

</llo_original>
